<compile_context>
chip_gen: v6e
topology: v6e:2x2x1
jax: 0.10.0
libtpu: 0.0.40
codegen_flags: <defaults>
</compile_context>

<pallas_src>
import functools

import jax
import jax.numpy as jnp
import numpy as np
from jax.experimental import pallas as pl
from jax.experimental.pallas import tpu as pltpu


def _dap_conv_kernel(x_ref, w_ref, o_ref, *, compute_dtype):
    # x_ref: (Bb, Cin, T) float32 activations, lane axis = pixels (lane-dense)
    # w_ref: (Cout, Cin)  1x1 conv weight in compute dtype (grid-invariant, resident)
    # o_ref: (Bb, Cout, T) output
    w = w_ref[...]
    for b in range(x_ref.shape[0]):                      # static, small unrolled loop
        x = x_ref[b].astype(compute_dtype)               # in-kernel cast (no extra HBM pass)
        y = jax.lax.dot_general(
            w, x,
            dimension_numbers=(((1,), (0,)), ((), ())),
            preferred_element_type=jnp.float32,
        )
        o_ref[b] = y.astype(o_ref.dtype)


def _dap_temp_kernel(x_ref, w_ref, o_ref):
    # dap_by_temperature=True path: temp = conv1x1(x) + 1e-6 ; out = x * temp
    # Cout == 1 -> MXU is ~idle anyway, so do the matvec on VPU/XLU in full f32.
    # x_ref: (Bb, C, T) float32
    # w_ref: (C, 1)     float32 (weight column)
    # o_ref: (Bb, C, T)
    w_col = w_ref[...]                                    # (C, 1) f32
    for b in range(x_ref.shape[0]):
        x = x_ref[b]                                      # (C, T) f32
        temp = jnp.sum(x * w_col, axis=0, keepdims=True) + 1e-6   # (1, T) f32
        o_ref[b] = (x * temp).astype(o_ref.dtype)


def _plan_blocks(bs, C, hw, out_bytes, *, block_budget_bytes=8 * 1024 * 1024,
                 lane_cap=32768):
    """Pick (Bb, grid_b, T, n_t): batch-fold, batch grid, pixel tile, pixel grid.

    Budget keeps a double-buffered in(f32)+out block comfortably under the
    32 MiB scoped VMEM limit we request (safe on v5e/v6e/v7x).
    """
    bytes_per_px = C * (4 + out_bytes)                    # f32 input + output per pixel
    p_cap = max(128, block_budget_bytes // bytes_per_px)  # pixels per block
    p_cap = min(p_cap, lane_cap)

    if hw > p_cap:
        # Large image: tile the pixel axis, no batch folding.
        Bb = 1
        T = max(128, (p_cap // 128) * 128)                # lane-dense tile
        n_t = pl.cdiv(hw, T)                              # ragged last tile handled by Pallas
    else:
        # Small image (coarse DICL level): take the full pixel axis and fold batches.
        T = hw
        n_t = 1
        Bb = max(1, min(bs, p_cap // max(hw, 1)))
        while bs % Bb != 0:                               # avoid ragged batch blocks
            Bb -= 1
    grid_b = pl.cdiv(bs, Bb)

    # Megacore (v7x has 2 TensorCores): guarantee >=2 parallel steps when possible.
    if grid_b * n_t < 2:
        if bs >= 2:
            Bb = (bs + 1) // 2
            while bs % Bb != 0:
                Bb -= 1
            grid_b = pl.cdiv(bs, Bb)
        elif hw >= 256:
            T = 128 * pl.cdiv(pl.cdiv(hw, 2), 128)
            n_t = pl.cdiv(hw, T)
    return Bb, grid_b, T, n_t


def dap_forward(x, weight, *, dap_by_temperature=False,
                compute_dtype=jnp.bfloat16, out_dtype=jnp.float32):
    """Pallas-TPU forward of DAP.

    x:      (bs, 1, du, dv, h, w) float32, du = dv = 2*md + 1
    weight: (Cout, Cin, 1, 1) PyTorch Conv2d weight (bias=False), Cin = du*dv,
            Cout = Cin (default) or 1 (dap_by_temperature=True)
    compute_dtype: MXU input dtype for the conv path (bf16 default; float32 for
            bit-faithful parity with PyTorch).
    out_dtype: output dtype (float32 default; bfloat16 halves store bytes).
    returns (bs, 1, du, dv, h, w) out_dtype
    """
    bs, one, du, dv, h, w = x.shape
    assert one == 1
    C = du * dv
    Cout, Cin, kh, kw = weight.shape
    assert (kh, kw) == (1, 1) and Cin == C
    hw = h * w

    out_bytes = jnp.dtype(out_dtype).itemsize
    Bb, grid_b, T, n_t = _plan_blocks(bs, C, hw, out_bytes)

    # Pure metadata reshape (NCHW-native, lane axis = h*w): no transpose, no pad,
    # no wrapper-side dtype cast of the activations.
    x2 = x.reshape(bs, C, hw)

    cparams = pltpu.CompilerParams(
        dimension_semantics=("parallel", "parallel"),
        vmem_limit_bytes=32 * 1024 * 1024,
    )

    if not dap_by_temperature:
        assert Cout == C
        w2 = weight.reshape(Cout, Cin).astype(compute_dtype)
        kernel = functools.partial(_dap_conv_kernel, compute_dtype=compute_dtype)
        out = pl.pallas_call(
            kernel,
            out_shape=jax.ShapeDtypeStruct((bs, Cout, hw), out_dtype),
            grid_spec=pltpu.PrefetchScalarGridSpec(
                num_scalar_prefetch=0,
                grid=(grid_b, n_t),
                in_specs=[
                    pl.BlockSpec((Bb, Cin, T), lambda b, t: (b, 0, t)),
                    pl.BlockSpec((Cout, Cin), lambda b, t: (0, 0)),
                ],
                out_specs=pl.BlockSpec((Bb, Cout, T), lambda b, t: (b, 0, t)),
            ),
            compiler_params=cparams,
        )(x2, w2)
    else:
        assert Cout == 1
        w_col = weight.reshape(Cin, 1).astype(jnp.float32)   # full-f32 temperature path
        out = pl.pallas_call(
            _dap_temp_kernel,
            out_shape=jax.ShapeDtypeStruct((bs, C, hw), out_dtype),
            grid_spec=pltpu.PrefetchScalarGridSpec(
                num_scalar_prefetch=0,
                grid=(grid_b, n_t),
                in_specs=[
                    pl.BlockSpec((Bb, Cin, T), lambda b, t: (b, 0, t)),
                    pl.BlockSpec((Cin, 1), lambda b, t: (0, 0)),
                ],
                out_specs=pl.BlockSpec((Bb, C, T), lambda b, t: (b, 0, t)),
            ),
            compiler_params=cparams,
        )(x2, w_col)

    return out.reshape(bs, 1, du, dv, h, w)


def _dap_reference(x, weight, *, dap_by_temperature=False, compute_dtype=jnp.float32):
    """Pure-JAX reference of DAP.forward. `compute_dtype` mimics the kernel's
    bf16-input / f32-accumulate matmul so tight tolerances can be used."""
    bs, _, du, dv, h, w = x.shape
    C = du * dv
    x2 = x.reshape(bs, C, h, w)
    xc = x2.astype(compute_dtype).astype(jnp.float32)
    wc = weight.astype(compute_dtype).astype(jnp.float32)
    y = jax.lax.conv_general_dilated(
        xc, wc, window_strides=(1, 1), padding="VALID",
        dimension_numbers=("NCHW", "OIHW", "NCHW"),
    )
    if dap_by_temperature:
        y = x2 * (y + 1e-6)
    return y.reshape(bs, 1, du, dv, h, w)


if __name__ == "__main__":
    key = jax.random.PRNGKey(0)
    k_x, k_w, k_wt = jax.random.split(key, 3)

    md = 3
    bs, h, w = 2, 16, 16
    du = dv = 2 * md + 1
    C = du * dv                                      # 49

    x = jax.random.normal(k_x, (bs, 1, du, dv, h, w), dtype=jnp.float32)
    w_conv = jax.random.normal(k_w, (C, C, 1, 1), dtype=jnp.float32) * 0.1
    w_temp = jax.random.normal(k_wt, (1, C, 1, 1), dtype=jnp.float32) * 0.1

    # --- default DAP path (dap_by_temperature=False), bf16 MXU / f32 accumulate ---
    out = jax.block_until_ready(dap_forward(x, w_conv, dap_by_temperature=False))
    ref_bf16 = _dap_reference(x, w_conv, compute_dtype=jnp.bfloat16)
    ref_f32 = _dap_reference(x, w_conv, compute_dtype=jnp.float32)
    np.testing.assert_allclose(np.asarray(out), np.asarray(ref_bf16), rtol=1e-3, atol=1e-3)
    np.testing.assert_allclose(np.asarray(out), np.asarray(ref_f32), rtol=5e-2, atol=5e-2)

    # --- f32 escape hatch for bit-faithful parity ---
    out_f32 = jax.block_until_ready(
        dap_forward(x, w_conv, dap_by_temperature=False, compute_dtype=jnp.float32))
    np.testing.assert_allclose(np.asarray(out_f32), np.asarray(ref_f32), rtol=1e-5, atol=1e-5)

    # --- dap_by_temperature=True variant (full f32 on VPU) ---
    out_t = jax.block_until_ready(dap_forward(x, w_temp, dap_by_temperature=True))
    ref_t_f32 = _dap_reference(x, w_temp, dap_by_temperature=True, compute_dtype=jnp.float32)
    np.testing.assert_allclose(np.asarray(out_t), np.asarray(ref_t_f32), rtol=1e-5, atol=1e-5)

    print("KERNEL_OK")
</pallas_src>

<mosaic_0001>
module attributes {stable_mosaic.version = 11 : i64} {
  func.func @_dap_conv_kernel(%arg0: i32, %arg1: i32, %arg2: memref<1x49x256xf32, #tpu.memory_space<vmem>>, %arg3: memref<49x49xbf16, #tpu.memory_space<vmem>>, %arg4: memref<1x49x256xf32, #tpu.memory_space<vmem>>) attributes {dimension_semantics = [#tpu.dimension_semantics<parallel>, #tpu.dimension_semantics<parallel>], iteration_bounds = array<i64: 2, 1>, scalar_prefetch = 0 : i64, scratch_operands = 0 : i64, tpu.core_type = #tpu.core_type<tc>, window_params = [{transform_indices = @transform_0, window_bounds = array<i64: 1, 49, 256>}, {pipeline_mode = #tpu.pipeline_mode<synchronous>, transform_indices = @transform_1, window_bounds = array<i64: 49, 49>}, {transform_indices = @transform_2, window_bounds = array<i64: 1, 49, 256>}]} {
    %c0 = arith.constant 0 : index
    %c0_0 = arith.constant 0 : index
    %0 = vector.load %arg3[%c0, %c0_0] : memref<49x49xbf16, #tpu.memory_space<vmem>>, vector<49x49xbf16>
    %c0_1 = arith.constant 0 : index
    %c0_2 = arith.constant 0 : index
    %c0_3 = arith.constant 0 : index
    %1 = vector.load %arg2[%c0_1, %c0_2, %c0_3] : memref<1x49x256xf32, #tpu.memory_space<vmem>>, vector<1x49x256xf32>
    %2 = vector.shape_cast %1 : vector<1x49x256xf32> to vector<49x256xf32>
    %3 = arith.truncf %2 : vector<49x256xf32> to vector<49x256xbf16>
    %cst = arith.constant dense<0.000000e+00> : vector<49x256xf32>
    %4 = tpu.matmul %0, %3, %cst {dimension_numbers = #tpu.dot_dimension_numbers<[1], [0], [0], [1], [0, 0, 1, 1], [], []>} : vector<49x49xbf16>, vector<49x256xbf16>, vector<49x256xf32> -> vector<49x256xf32>
    %c0_4 = arith.constant 0 : index
    %c0_5 = arith.constant 0 : index
    %c0_6 = arith.constant 0 : index
    %5 = vector.load %arg4[%c0_4, %c0_5, %c0_6] : memref<1x49x256xf32, #tpu.memory_space<vmem>>, vector<1x49x256xf32>
    %6 = vector.shape_cast %5 : vector<1x49x256xf32> to vector<49x256xf32>
    %7 = vector.shape_cast %4 : vector<49x256xf32> to vector<1x49x256xf32>
    tpu.vector_store %arg4[%c0_4, %c0_5, %c0_6], %7 {strides = array<i32>} : memref<1x49x256xf32, #tpu.memory_space<vmem>>, vector<1x49x256xf32>,
    return
  }
  func.func @transform_0(%arg0: i32, %arg1: i32) -> (i32, i32, i32) {
    %c0_i32 = arith.constant 0 : i32
    %c0_i32_0 = arith.constant 0 : i32
    return %arg0, %c0_i32, %arg1 : i32, i32, i32
  }
  func.func @transform_1(%arg0: i32, %arg1: i32) -> (i32, i32) {
    %c0_i32 = arith.constant 0 : i32
    %c0_i32_0 = arith.constant 0 : i32
    %c0_i32_1 = arith.constant 0 : i32
    return %c0_i32, %c0_i32_0 : i32, i32
  }
  func.func @transform_2(%arg0: i32, %arg1: i32) -> (i32, i32, i32) {
    %c0_i32 = arith.constant 0 : i32
    %c0_i32_0 = arith.constant 0 : i32
    return %arg0, %c0_i32, %arg1 : i32, i32, i32
  }
}

</mosaic_0001>

<llo_original>
// kernel: tpu_custom_call.1
$region0: #{tpu_custom_call.1}
  #allocation0 [shape = 'u32[]', space=smem, size = 0x4, offset = 0x4, fixed_abs, tag = 'smem constant byte address 0x4 - core index']
  #allocation1 [shape = 'u32[144,128]{1,0:T(1,128)}', space=vmem, size = 0x12000, scoped, tag = 'internal scratch']
  %s0 = inlined_call_operand.vmem [shape: f32[2,49,256], index: 0, kind: input, shape index: {}]
  %s1 = inlined_call_operand.vmem [shape: bf16[49,49], index: 1, kind: input, shape index: {}]
  %s2 = inlined_call_operand.vmem [shape: f32[2,49,256], index: 2, kind: output, shape index: {}]
  %s3 = sld [smem:[#allocation0]]
  $region41: #{tpu_custom_call.1} parent=0
    _
  %s5 = ssub.s32 1, %s3
  %s6 = scalar_select 0, %s5, %s3
  loop: start=0, step=1, limit=4
  $region2: #{tpu_custom_call.1} parent=0 // loop_pre_header
    _
  $region3: #{tpu_custom_call.1} parent=0 // loop_header
    %s8 = sphi 0, %s12
    %p9 = scmp.ge.s32.totalorder %s8, 4
    %s15 = sphi 0, %s27
    %s16 = sphi 0, %s23
    %s17 = sphi 0, %s15
    %s18 = sphi 0, %s16
    %s19 = sphi 0, %s17
    %s20 = sphi 0, %s18
    %s32 = sphi 0, %s34
    %s35 = sphi 0, %s32
    %s36 = sphi 0, %s35
    %s52 = sphi 0, %s36
    %s56 = sphi 0, %s56
    %s58 = sphi 0, %s56
    %s59 = sphi 0, %s58
    %s73 = sphi 0, %s59
    %s81 = sphi 0, %s83
    %s84 = sphi 0, %s81
    %s85 = sphi 0, %s84
    %s101 = sphi 0, %s85
  $region4: #{tpu_custom_call.1} parent=0 // loop_header_branch
    %11 = sbr.rel (%p9) target = $region8
  $region5: #{tpu_custom_call.1} parent=0 // loop_body
    %s13 = ssub.s32 %s8, 1
    %s14 = ssub.s32 %s8, 2
    %s21 = sadd.s32 1, %s16
    %p22 = scmp.ge.s32.totalorder %s21, 1
    %s23 = scalar_select %p22, 0, %s21
    %s24 = sadd.s32 1, %s15
    %s25 = scalar_select %p22, %s24, %s15
    %p26 = scmp.ge.s32.totalorder %s25, 2
    %s27 = scalar_select %p26, 0, %s25
    %s28 = ssub.s32 %s15, %s27
    %s29 = ssub.s32 %s16, %s23
    %s30 = sor.u32 %s28, %s29
    %p31 = scmp.eq.s32.totalorder %s30, 0
    %s33 = sadd.s32 %s32, 1
    %s34 = scalar_select %p31, %s32, %s33
    %p37 = pneg %p31
    %p38 = scmp.eq.s32.totalorder %s8, 1
    %p39 = por %p37, %p38
    %p40 = scmp.ne.s32.totalorder %s32, %s35
    %p41 = scmp.eq.s32.totalorder %s8, 0
    %p42 = por %p40, %p41
    %p43 = scmp.ne.s32.totalorder %s32, %s35
    %p44 = scmp.eq.s32.totalorder %s13, 1
    %p45 = por %p43, %p44
    %p46 = scmp.ne.s32.totalorder %s35, %s36
    %p47 = scmp.eq.s32.totalorder %s13, 0
    %p48 = por %p46, %p47
    %p49 = scmp.ne.s32.totalorder %s35, %s36
    %p50 = scmp.eq.s32.totalorder %s14, 1
    %p51 = por %p49, %p50
    %p53 = scmp.ne.s32.totalorder %s36, %s52
    %p54 = scmp.eq.s32.totalorder %s14, 0
    %p55 = por %p53, %p54
    %s57 = sadd.s32 %s56, 1
    %p60 = scmp.eq.s32.totalorder %s8, 1
    %p61 = scmp.ne.s32.totalorder %s56, %s58
    %p62 = scmp.eq.s32.totalorder %s8, 0
    %p63 = por %p61, %p62
    %p64 = scmp.ne.s32.totalorder %s56, %s58
    %p65 = scmp.eq.s32.totalorder %s13, 1
    %p66 = por %p64, %p65
    %p67 = scmp.ne.s32.totalorder %s58, %s59
    %p68 = scmp.eq.s32.totalorder %s13, 0
    %p69 = por %p67, %p68
    %p70 = scmp.ne.s32.totalorder %s58, %s59
    %p71 = scmp.eq.s32.totalorder %s14, 1
    %p72 = por %p70, %p71
    %p74 = scmp.ne.s32.totalorder %s59, %s73
    %p75 = scmp.eq.s32.totalorder %s14, 0
    %p76 = por %p74, %p75
    %s77 = ssub.s32 %s15, %s27
    %s78 = ssub.s32 %s16, %s23
    %s79 = sor.u32 %s77, %s78
    %p80 = scmp.eq.s32.totalorder %s79, 0
    %s82 = sadd.s32 %s81, 1
    %s83 = scalar_select %p80, %s81, %s82
    %p86 = pneg %p80
    %p87 = scmp.eq.s32.totalorder %s8, 1
    %p88 = por %p86, %p87
    %p89 = scmp.ne.s32.totalorder %s81, %s84
    %p90 = scmp.eq.s32.totalorder %s8, 0
    %p91 = por %p89, %p90
    %p92 = scmp.ne.s32.totalorder %s81, %s84
    %p93 = scmp.eq.s32.totalorder %s13, 1
    %p94 = por %p92, %p93
    %p95 = scmp.ne.s32.totalorder %s84, %s85
    %p96 = scmp.eq.s32.totalorder %s13, 0
    %p97 = por %p95, %p96
    %p98 = scmp.ne.s32.totalorder %s84, %s85
    %p99 = scmp.eq.s32.totalorder %s14, 1
    %p100 = por %p98, %p99
    %p102 = scmp.ne.s32.totalorder %s85, %s101
    %p103 = scmp.eq.s32.totalorder %s14, 0
    %p104 = por %p102, %p103
    %p105 = scmp.le.s32.totalorder 1, %s8
    %p106 = scmp.lt.s32.totalorder %s8, 3
    %p107 = pnand %p105, %p106
    %p108 = pneg %p107
    // Predicated region
    $region9: #{tpu_custom_call.1} parent=5 // pred_check
      _
    $region10: #{tpu_custom_call.1} parent=5 // pred_check_branch
      %110 = sbr.rel (%p107) target = $region12
    $region11: #{tpu_custom_call.1} parent=5 // pred_region
      %s111 = ssub.s32 %s8, 1
      // Predicated region
      $region13: #{tpu_custom_call.1} parent=11 // pred_check
        %p112 = pneg %p69
      $region14: #{tpu_custom_call.1} parent=11 // pred_check_branch
        %114 = sbr.rel (%p112) target = $region16
      $region15: #{tpu_custom_call.1} parent=11 // pred_region
        _
      $region16: #{tpu_custom_call.1} parent=11 // pred_fallthru
        _
    $region12: #{tpu_custom_call.1} parent=5 // pred_fallthru
      _
    %p115 = scmp.lt.s32.totalorder %s8, 2
    // Predicated region
    $region17: #{tpu_custom_call.1} parent=5 // pred_check
      %p116 = pneg %p115
    $region18: #{tpu_custom_call.1} parent=5 // pred_check_branch
      %118 = sbr.rel (%p116) target = $region20
    $region19: #{tpu_custom_call.1} parent=5 // pred_region
      // Predicated region
      $region21: #{tpu_custom_call.1} parent=19 // pred_check
        %p119 = pneg %p42
      $region22: #{tpu_custom_call.1} parent=19 // pred_check_branch
        %121 = sbr.rel (%p119) target = $region24
      $region23: #{tpu_custom_call.1} parent=19 // pred_region
        %s122 = smul.u32 2, %s16
        %p123 = scmp.lt.s32.totalorder %s15, 1
        %s124 = scalar_select %p123, %s15, 1
        %p125 = scmp.lt.s32.totalorder %s122, 1
        %s126 = scalar_select %p125, %s122, 1
        %s127 = smul.addr %s124, 14
        %s128 = sadd.s32 %s126, %s127
        %s129 = smul.addr %s128, 8
        %s130 = scalar_lea.vmem %s0, %s129
        %s131 = smul.u32 2, %s16
      $region24: #{tpu_custom_call.1} parent=19 // pred_fallthru
        _
    $region20: #{tpu_custom_call.1} parent=5 // pred_fallthru
      _
    %p132 = scmp.le.s32.totalorder 1, %s8
    %p133 = scmp.lt.s32.totalorder %s8, 3
    %p134 = pnand %p132, %p133
    %p135 = pneg %p134
    // Predicated region
    $region25: #{tpu_custom_call.1} parent=5 // pred_check
      _
    $region26: #{tpu_custom_call.1} parent=5 // pred_check_branch
      %137 = sbr.rel (%p134) target = $region28
    $region27: #{tpu_custom_call.1} parent=5 // pred_region
      %s138 = ssub.s32 %s8, 1
      %s139 = smul.u32 2, %s18
      %p140 = scmp.lt.s32.totalorder %s17, 1
      %s141 = scalar_select %p140, %s17, 1
      %p142 = scmp.lt.s32.totalorder %s139, 1
      %s143 = scalar_select %p142, %s139, 1
      %s144 = smul.addr %s141, 14
      %s145 = sadd.s32 %s143, %s144
      %s146 = smul.addr %s145, 8
      %s147 = scalar_lea.vmem %s0, %s146
      %p148 = pneg %p48
      %p149 = pneg %p45
      %p150 = pneg %p69
      %p151 = pneg %p66
      %p152 = pneg %p97
      %p153 = pneg %p94
      %s154 = smul.u32 2, %s18
      %p155 = scmp.lt.s32.totalorder %s17, 1
      %s156 = scalar_select %p155, %s17, 1
      %p157 = scmp.lt.s32.totalorder %s154, 1
      %s158 = scalar_select %p157, %s154, 1
      %s159 = smul.addr %s156, 14
      %s160 = sadd.s32 %s158, %s159
      %s161 = smul.addr %s160, 8
      %s162 = scalar_lea.vmem %s2, %s161
      %s163 = smul.u32 2, %s18
      %p164 = scmp.lt.s32.totalorder %s17, 1
      %s165 = scalar_select %p164, %s17, 1
      %p166 = scmp.lt.s32.totalorder %s163, 1
      %s167 = scalar_select %p166, %s163, 1
      %s168 = smul.addr %s165, 14
      %s169 = sadd.s32 %s167, %s168
      %s170 = smul.addr %s169, 8
      %s171 = scalar_lea.vmem %s0, %s170
      %s172 = smul.u32 2, %s18
      %s173 = smul.u32 2, %s18
      %p174 = scmp.lt.s32.totalorder %s17, 1
      %s175 = scalar_select %p174, %s17, 1
      %p176 = scmp.lt.s32.totalorder %s173, 1
      %s177 = scalar_select %p176, %s173, 1
      %s178 = smul.addr %s175, 14
      %s179 = sadd.s32 %s177, %s178
      %s180 = smul.addr %s179, 8
      %s181 = scalar_lea.vmem %s2, %s180
      %s182 = smul.u32 2, %s18
      %v184 = vld [vmem:[%s1] sm:$0xf]
      %v185 = vld [vmem:[%s1 + $0x4] sm:$0xf]
      %v186 = vld [vmem:[%s1 + $0x8] sm:$0xf]
      %v187 = vld [vmem:[%s1 + $0xc] sm:$0xf]
      %v188 = vld [vmem:[%s1 + $0x10] sm:$0xf]
      %v189 = vld [vmem:[%s1 + $0x14] sm:$0xf]
      %v190 = vld [vmem:[%s1 + $0x18] sm:$0x1]
      %v191 = vld [vmem:[%s171] sm:$0xff]
      %v192 = vld [vmem:[%s171 + $0x8] sm:$0xff]
      %v193 = vld [vmem:[%s171 + $0x10] sm:$0xff]
      %v194 = vld [vmem:[%s171 + $0x18] sm:$0xff]
      %v195 = vld [vmem:[%s171 + $0x20] sm:$0xff]
      %v196 = vld [vmem:[%s171 + $0x28] sm:$0xff]
      %v197 = vld [vmem:[%s171 + $0x30] sm:$0xff]
      %v198 = vld [vmem:[%s171 + $0x38] sm:$0xff]
      %v199 = vld [vmem:[%s171 + $0x40] sm:$0xff]
      %v200 = vld [vmem:[%s171 + $0x48] sm:$0xff]
      %v201 = vld [vmem:[%s171 + $0x50] sm:$0xff]
      %v202 = vld [vmem:[%s171 + $0x58] sm:$0xff]
      %v203 = vld [vmem:[%s171 + $0x60] sm:$0x1]
      %v204 = vld [vmem:[%s171 + $0x68] sm:$0x1]
      %v205 = vpack.c.bf16 %v193, %v191
      %v206 = vpack.c.bf16 %v194, %v192
      %v207 = vpack.c.bf16 %v197, %v195
      %v208 = vpack.c.bf16 %v198, %v196
      %v209 = vpack.c.bf16 %v201, %v199
      %v210 = vpack.c.bf16 %v202, %v200
      %v211 = vpack.c.bf16 %v203, %v203
      %v212 = vpack.c.bf16 %v204, %v204
      %v220 = vunpack.c.l.b16 %v184
      %v221 = vunpack.c.l.b16 %v185
      %v222 = vunpack.c.l.b16 %v186
      %v223 = vunpack.c.l.b16 %v187
      %v224 = vunpack.c.l.b16 %v188
      %v225 = vunpack.c.l.b16 %v189
      %v226 = vunpack.c.l.b16 %v190
      %v227 = vpack.c.b16 %v221, %v220
      %v228 = vpack.c.b16 %v223, %v222
      %v229 = vpack.c.b16 %v225, %v224
      %v230 = vpack.c.b16 %v226, %v226
      %vm231 = vcmask 400384
      %v233 = vsel %vm231, %v227, 0
      %v236 = vsel %vm231, %v228, 0
      %v239 = vsel %vm231, %v229, 0
      %v242 = vsel %vm231, %v230, 0
      %vm244 = vcmask 1040384
      %v245 = vsel 0, 4294967295, 65535
      %v246 = vsel %vm244, %v245, 0
      %v248 = vand.u32 %v211, %v246
      %v251 = vand.u32 %v212, %v246
      %253 = vmatprep.subr.bf16.mxu0 0
      %254 = vmatpush1.bf16.msra.mxu0 0
      %255 = vmatprep.subr.bf16.mxu0 0
      %256 = vmatpush1.bf16.msra.mxu0 0
      %257 = vmatprep.subr.bf16.mxu0 0
      %258 = vmatpush1.bf16.msra.mxu0 0
      %259 = vmatprep.subr.bf16.mxu0 0
      %260 = vmatpush1.bf16.msra.mxu0 0
      %261 = vmatprep.subr.bf16.mxu0 %v251
      %262 = vmatpush1.bf16.msra.mxu0 %v248
      %263 = vmatprep.subr.bf16.mxu0 %v210
      %264 = vmatpush1.bf16.msra.mxu0 %v209
      %265 = vmatprep.subr.bf16.mxu0 %v208
      %266 = vmatpush1.bf16.msra.mxu0 %v207
      %267 = vmatprep.subr.bf16.mxu0 %v206
      %268 = vmatpush1.bf16.msra.mxu0 %v205
      %269 = vmatprep.subr.bf16.mxu0 0
      %270 = vmatpush2.bf16.msra.mxu0 0
      %271 = vmatprep.subr.bf16.mxu0 0
      %272 = vmatpush2.bf16.msra.mxu0 0
      %273 = vmatprep.subr.bf16.mxu0 0
      %274 = vmatpush2.bf16.msra.mxu0 0
      %275 = vmatprep.subr.bf16.mxu0 0
      %276 = vmatpush2.bf16.msra.mxu0 0
      %277 = vmatprep.subr.bf16.mxu0 0
      %278 = vmatpush2.bf16.msra.mxu0 0
      %279 = vmatprep.subr.bf16.mxu0 0
      %280 = vmatpush2.bf16.msra.mxu0 0
      %281 = vmatprep.subr.bf16.mxu0 0
      %282 = vmatpush2.bf16.msra.mxu0 0
      %283 = vmatprep.subr.bf16.mxu0 0
      %284 = vmatpush2.bf16.msra.mxu0 0
      %285 = vmatprep.mubr.bf16.mxu0 0
      %286 = vmatmul.mubr.bf16.gmra.mxu0 %v233
      %v287 = vpop.f32.mrf.mxu0
      %v288 = vadd.f32 0.0, %v287
      %v289 = vpop.f32.mrf.mxu0
      %v290 = vadd.f32 0.0, %v289
      %v291 = vpop.f32.mrf.mxu0
      %v292 = vadd.f32 0.0, %v291
      %v293 = vpop.f32.mrf.mxu0
      %v294 = vadd.f32 0.0, %v293
      %295 = vmatprep.mubr.bf16.mxu0 0
      %296 = vmatmul.mubr.bf16.gmra.mxu0 %v236
      %v297 = vpop.f32.mrf.mxu0
      %v298 = vadd.f32 0.0, %v297
      %v299 = vpop.f32.mrf.mxu0
      %v300 = vadd.f32 0.0, %v299
      %v301 = vpop.f32.mrf.mxu0
      %v302 = vadd.f32 0.0, %v301
      %v303 = vpop.f32.mrf.mxu0
      %v304 = vadd.f32 0.0, %v303
      %305 = vmatprep.mubr.bf16.mxu0 0
      %306 = vmatmul.mubr.bf16.gmra.mxu0 %v239
      %v307 = vpop.f32.mrf.mxu0
      %v308 = vadd.f32 0.0, %v307
      %v309 = vpop.f32.mrf.mxu0
      %v310 = vadd.f32 0.0, %v309
      %v311 = vpop.f32.mrf.mxu0
      %v312 = vadd.f32 0.0, %v311
      %v313 = vpop.f32.mrf.mxu0
      %v314 = vadd.f32 0.0, %v313
      %315 = vmatprep.mubr.bf16.mxu0 0
      %316 = vmatmul.mubr.bf16.gmra.mxu0 %v242
      %v317 = vpop.f32.mrf.mxu0
      %v318 = vadd.f32 0.0, %v317
      %v319 = vpop.f32.mrf.mxu0
      %v320 = vadd.f32 0.0, %v319
      %v321 = vpop.f32.mrf.mxu0
      %v322 = vpop.f32.mrf.mxu0
      %323 = vdwg.mxu0
      %324 = vst [vmem:[%s181] sm:$0xff] %v288
      %325 = vst [vmem:[%s181 + $0x8] sm:$0xff] %v290
      %326 = vst [vmem:[%s181 + $0x10] sm:$0xff] %v292
      %327 = vst [vmem:[%s181 + $0x18] sm:$0xff] %v294
      %328 = vst [vmem:[%s181 + $0x20] sm:$0xff] %v298
      %329 = vst [vmem:[%s181 + $0x28] sm:$0xff] %v300
      %330 = vst [vmem:[%s181 + $0x30] sm:$0xff] %v302
      %331 = vst [vmem:[%s181 + $0x38] sm:$0xff] %v304
      %332 = vst [vmem:[%s181 + $0x40] sm:$0xff] %v308
      %333 = vst [vmem:[%s181 + $0x48] sm:$0xff] %v310
      %334 = vst [vmem:[%s181 + $0x50] sm:$0xff] %v312
      %335 = vst [vmem:[%s181 + $0x58] sm:$0xff] %v314
      %336 = vst [vmem:[%s181 + $0x60] sm:$0x1] %v318
      %337 = vst [vmem:[%s181 + $0x68] sm:$0x1] %v320
      %s338 = smul.u32 2, %s18
      %p339 = scmp.lt.s32.totalorder %s17, 1
      %s340 = scalar_select %p339, %s17, 1
      %p341 = scmp.lt.s32.totalorder %s338, 1
      %s342 = scalar_select %p341, %s338, 1
      %s343 = smul.addr %s340, 14
      %s344 = sadd.s32 %s342, %s343
      %s345 = smul.addr %s344, 8
      %s346 = scalar_lea.vmem %s2, %s345
      // Predicated region
      $region29: #{tpu_custom_call.1} parent=27 // pred_check
        %p347 = pneg %p94
      $region30: #{tpu_custom_call.1} parent=27 // pred_check_branch
        %349 = sbr.rel (%p347) target = $region32
      $region31: #{tpu_custom_call.1} parent=27 // pred_region
        %s350 = smul.u32 2, %s18
      $region32: #{tpu_custom_call.1} parent=27 // pred_fallthru
        _
    $region28: #{tpu_custom_call.1} parent=5 // pred_fallthru
      _
    %p351 = scmp.le.s32.totalorder 2, %s8
    // Predicated region
    $region33: #{tpu_custom_call.1} parent=5 // pred_check
      %p352 = pneg %p351
    $region34: #{tpu_custom_call.1} parent=5 // pred_check_branch
      %354 = sbr.rel (%p352) target = $region36
    $region35: #{tpu_custom_call.1} parent=5 // pred_region
      %s355 = ssub.s32 %s8, 2
      // Predicated region
      $region37: #{tpu_custom_call.1} parent=35 // pred_check
        %p356 = pneg %p100
      $region38: #{tpu_custom_call.1} parent=35 // pred_check_branch
        %358 = sbr.rel (%p356) target = $region40
      $region39: #{tpu_custom_call.1} parent=35 // pred_region
        %s359 = smul.u32 2, %s20
        %p360 = scmp.lt.s32.totalorder %s19, 1
        %s361 = scalar_select %p360, %s19, 1
        %p362 = scmp.lt.s32.totalorder %s359, 1
        %s363 = scalar_select %p362, %s359, 1
        %s364 = smul.addr %s361, 14
        %s365 = sadd.s32 %s363, %s364
        %s366 = smul.addr %s365, 8
        %s367 = scalar_lea.vmem %s2, %s366
      $region40: #{tpu_custom_call.1} parent=35 // pred_fallthru
        _
    $region36: #{tpu_custom_call.1} parent=5 // pred_fallthru
      _
  $region6: #{tpu_custom_call.1} parent=0 // loop_footer
    %s12 = sadd.s32 1, %s8
  $region7: #{tpu_custom_call.1} parent=0 // loop_footer_branch
    %7 = sbr.rel target = $region3
  $region8: #{tpu_custom_call.1} parent=0 // loop_exit
    _

</llo_original>
